<compile_context>
chip_gen: v5e
topology: v5e:2x2
jax: 0.10.0
libtpu: 0.0.40
codegen_flags: <defaults>
</compile_context>

<pallas_src>
import jax
import jax.numpy as jnp
from jax import lax
from jax.experimental import pallas as pl
from jax.experimental.pallas import tpu as pltpu


def _round_up(x, m):
    return ((x + m - 1) // m) * m


def _linear_kernel(x_ref, w_ref, b_ref, o_ref):
    """One batch tile of y = x @ W.T + b.

    x_ref : (tb, K)  features tile (f32 or bf16)
    w_ref : (N, K)   full weight, torch layout (num_classes, feat_dim)
    b_ref : (1, N)   full bias (f32)
    o_ref : (tb, N)  output tile (f32)
    """
    x = x_ref[...]
    # bf16 -> f32 cast is exact; no-op when features are already bf16 (then
    # the MXU runs its native bf16 path, still accumulating in f32 below).
    w = w_ref[...].astype(x.dtype)
    y = lax.dot_general(
        x, w,
        dimension_numbers=(((1,), (1,)), ((), ())),  # contract feat_dim of both
        preferred_element_type=jnp.float32,
    )
    o_ref[...] = (y + b_ref[...]).astype(o_ref.dtype)


def prepare_linear_params(weight, bias, *, param_dtype=jnp.float32):
    """One-time parameter prep (do NOT run per forward call).

    weight: (num_classes, feat_dim) torch layout; bias: (num_classes,).
    The weight keeps its torch layout (lane-dense, unpadded in HBM).
    Pass param_dtype=jnp.bfloat16 (with bf16 features) for large-batch use.
    """
    w = jnp.asarray(weight, param_dtype)                # (num_classes, feat_dim)
    b = jnp.asarray(bias, jnp.float32).reshape(1, -1)   # (1, num_classes)
    return w, b


def linear_classifier(features, w, b, *, tb=512):
    """features: (B, feat_dim) f32 or bf16; w, b from prepare_linear_params.

    Returns (B, num_classes) float32, matching torch y = x @ W.T + b.
    """
    B, K = features.shape
    N, K2 = w.shape
    assert K == K2 and b.shape == (1, N)

    # Batch tiling:
    #  - small B: a single full-extent block (no padding anywhere);
    #  - large B: cap tb so the grid has >= 2 "parallel" steps (v7x has two
    #    TensorCores) while keeping the double-buffered x tile inside the
    #    default scoped-VMEM budget on all generations (tb=512 f32 ~ 8 MB).
    if B <= tb:
        tb = B
    else:
        tb = max(8, min(tb, _round_up(pl.cdiv(B, 2), 8)))
    grid = (pl.cdiv(B, tb),)

    x_bytes = B * K * features.dtype.itemsize
    w_bytes = w.size * w.dtype.itemsize
    cost = pl.CostEstimate(
        flops=2 * B * K * N,
        transcendentals=0,
        bytes_accessed=x_bytes + w_bytes + b.size * 4 + B * N * 4,
    )

    return pl.pallas_call(
        _linear_kernel,
        out_shape=jax.ShapeDtypeStruct((B, N), jnp.float32),
        grid=grid,
        in_specs=[
            pl.BlockSpec((tb, K), lambda i: (i, 0)),   # features tile
            pl.BlockSpec((N, K), lambda i: (0, 0)),    # full weight (resident)
            pl.BlockSpec((1, N), lambda i: (0, 0)),    # full bias (resident)
        ],
        out_specs=pl.BlockSpec((tb, N), lambda i: (i, 0)),
        compiler_params=pltpu.CompilerParams(
            dimension_semantics=("parallel",),
        ),
        cost_estimate=cost,
    )(features, w, b)


if __name__ == "__main__":
    # LinearClassifier(name='resnet50', num_classes=10): feat_dim = 2048.
    B, FEAT_DIM, NUM_CLASSES = 2, 2048, 10

    key = jax.random.PRNGKey(0)
    k_x, k_w, k_b = jax.random.split(key, 3)

    # Deterministic parameter init (mimicking nn.Linear's uniform fan-in init).
    bound = 1.0 / (FEAT_DIM ** 0.5)
    features = jax.random.normal(k_x, (B, FEAT_DIM), dtype=jnp.float32)
    weight = jax.random.uniform(
        k_w, (NUM_CLASSES, FEAT_DIM), minval=-bound, maxval=bound,
        dtype=jnp.float32)
    bias = jax.random.uniform(
        k_b, (NUM_CLASSES,), minval=-bound, maxval=bound, dtype=jnp.float32)

    # --- f32 path: exact nn.Linear semantics, single block at B=2. ---
    w32, b32 = prepare_linear_params(weight, bias)           # f32, unpadded
    out = jax.block_until_ready(linear_classifier(features, w32, b32))
    ref = features @ weight.T + bias
    assert out.shape == (B, NUM_CLASSES)
    assert jnp.allclose(out, ref, atol=1e-5, rtol=1e-5)

    # --- bf16 path (large-batch config): bf16 params + bf16 features, 2-step
    # grid so both v7x TensorCores would get work. f32 accumulation kept. ---
    B2 = 64
    feats2 = jax.random.normal(jax.random.PRNGKey(1), (B2, FEAT_DIM),
                               dtype=jnp.float32)
    wbf, bbf = prepare_linear_params(weight, bias, param_dtype=jnp.bfloat16)
    out2 = jax.block_until_ready(
        linear_classifier(feats2.astype(jnp.bfloat16), wbf, bbf, tb=32))
    ref2 = feats2 @ weight.T + bias
    assert out2.shape == (B2, NUM_CLASSES)
    assert jnp.allclose(out2, ref2, atol=5e-2, rtol=5e-2)

    print("KERNEL_OK")
</pallas_src>

<mosaic_0001>
module attributes {stable_mosaic.version = 11 : i64} {
  func.func @_linear_kernel(%arg0: i32, %arg1: memref<2x2048xf32, #tpu.memory_space<vmem>>, %arg2: memref<10x2048xf32, #tpu.memory_space<vmem>>, %arg3: memref<1x10xf32, #tpu.memory_space<vmem>>, %arg4: memref<2x10xf32, #tpu.memory_space<vmem>>) attributes {dimension_semantics = [#tpu.dimension_semantics<parallel>], iteration_bounds = array<i64: 1>, scalar_prefetch = 0 : i64, scratch_operands = 0 : i64, tpu.core_type = #tpu.core_type<tc>, window_params = [{transform_indices = @transform_0, window_bounds = array<i64: 2, 2048>}, {pipeline_mode = #tpu.pipeline_mode<synchronous>, transform_indices = @transform_1, window_bounds = array<i64: 10, 2048>}, {pipeline_mode = #tpu.pipeline_mode<synchronous>, transform_indices = @transform_2, window_bounds = array<i64: 1, 10>}, {transform_indices = @transform_3, window_bounds = array<i64: 2, 10>}]} {
    %c0 = arith.constant 0 : index
    %c0_0 = arith.constant 0 : index
    %0 = vector.load %arg1[%c0, %c0_0] : memref<2x2048xf32, #tpu.memory_space<vmem>>, vector<2x2048xf32>
    %c0_1 = arith.constant 0 : index
    %c0_2 = arith.constant 0 : index
    %1 = vector.load %arg2[%c0_1, %c0_2] : memref<10x2048xf32, #tpu.memory_space<vmem>>, vector<10x2048xf32>
    %cst = arith.constant dense<0.000000e+00> : vector<2x10xf32>
    %2 = tpu.matmul %0, %1, %cst {dimension_numbers = #tpu.dot_dimension_numbers<[1], [1], [0], [0], [0, 0, 1, 0], [], []>} : vector<2x2048xf32>, vector<10x2048xf32>, vector<2x10xf32> -> vector<2x10xf32>
    %c0_3 = arith.constant 0 : index
    %c0_4 = arith.constant 0 : index
    %3 = vector.load %arg3[%c0_3, %c0_4] : memref<1x10xf32, #tpu.memory_space<vmem>>, vector<1x10xf32>
    %4 = vector.broadcast %3 : vector<1x10xf32> to vector<2x10xf32>
    %5 = arith.addf %2, %4 : vector<2x10xf32>
    %c0_5 = arith.constant 0 : index
    %c0_6 = arith.constant 0 : index
    %6 = vector.load %arg4[%c0_5, %c0_6] : memref<2x10xf32, #tpu.memory_space<vmem>>, vector<2x10xf32>
    tpu.vector_store %arg4[%c0_5, %c0_6], %5 {strides = array<i32>} : memref<2x10xf32, #tpu.memory_space<vmem>>, vector<2x10xf32>,
    return
  }
  func.func @transform_0(%arg0: i32) -> (i32, i32) {
    %c0_i32 = arith.constant 0 : i32
    %c0_i32_0 = arith.constant 0 : i32
    return %arg0, %c0_i32 : i32, i32
  }
  func.func @transform_1(%arg0: i32) -> (i32, i32) {
    %c0_i32 = arith.constant 0 : i32
    %c0_i32_0 = arith.constant 0 : i32
    %c0_i32_1 = arith.constant 0 : i32
    return %c0_i32, %c0_i32_0 : i32, i32
  }
  func.func @transform_2(%arg0: i32) -> (i32, i32) {
    %c0_i32 = arith.constant 0 : i32
    %c0_i32_0 = arith.constant 0 : i32
    %c0_i32_1 = arith.constant 0 : i32
    return %c0_i32, %c0_i32_0 : i32, i32
  }
  func.func @transform_3(%arg0: i32) -> (i32, i32) {
    %c0_i32 = arith.constant 0 : i32
    %c0_i32_0 = arith.constant 0 : i32
    return %arg0, %c0_i32 : i32, i32
  }
}

</mosaic_0001>

<llo_original>
// kernel: tpu_custom_call.1
$region0: #{tpu_custom_call.1}
  #allocation0 [shape = 'u32[]', space=smem, size = 0x4, offset = 0x4, fixed_abs, tag = 'smem constant byte address 0x4 - core index']
  #allocation1 [shape = 'u32[72,128]{1,0:T(1,128)}', space=vmem, size = 0x9000, scoped, tag = 'internal scratch']
  %s0 = inlined_call_operand.hbm [shape: f32[2,2048], index: 0, kind: input, shape index: {}]
  %s1 = inlined_call_operand.hbm [shape: f32[10,2048], index: 1, kind: input, shape index: {}]
  %s2 = inlined_call_operand.vmem [shape: f32[1,10], index: 2, kind: input, shape index: {}]
  %s3 = inlined_call_operand.hbm [shape: f32[2,10], index: 3, kind: output, shape index: {}]
  %s4 = sld [smem:[#allocation0]]
  $region30: #{tpu_custom_call.1} parent=0
    _
  %s6 = ssub.s32 1, %s4
  %s7 = scalar_select 0, %s6, %s4
  $region1: #{tpu_custom_call.1} parent=0
    #allocation2 [shape = 'u8[16384]{0}', space=vmem, size = 0x4000, scoped, tag = 'input window, operand 0, single buffered']
    #allocation3 [shape = 's32[1]{0}', space=sflag, size = 0x4, scoped, tag = 'scoped memory for tpu_custom_call.1']
    #allocation4 [shape = 's32[1]{0}', space=sflag, size = 0x4, scoped, tag = 'scoped memory for tpu_custom_call.1']
    #allocation5 [shape = 'u8[131072]{0}', space=vmem, size = 0x20000, scoped, tag = 'input window, operand 1, single buffered']
    #allocation6 [shape = 's32[1]{0}', space=sflag, size = 0x4, scoped, tag = 'scoped memory for tpu_custom_call.1']
    #allocation7 [shape = 'u8[1024]{0}', space=vmem, size = 0x400, scoped, tag = 'output window, operand 0, single buffered']
    %8 = vsyncpa [#allocation3], 0
    %9 = vsyncpa [#allocation6], 0
    %10 = vsyncpa [#allocation4], 0
    // Predicated region
    $region2: #{tpu_custom_call.1} parent=1 // pred_check
      _
    $region3: #{tpu_custom_call.1} parent=1 // pred_check_branch
      %12 = sbr.rel (0) target = $region5
    $region4: #{tpu_custom_call.1} parent=1 // pred_region
      %14 = vsyncadd [#allocation3], 0
      %s16 = sshll.u32 %s0, 4
      %s17 = int_to_ptr.hbm [resolvable:$true] %s16
      %s18 = sshll.u32 [#allocation2], 4
      %s19 = int_to_ptr.vmem [resolvable:$true] %s18
      %21 = dma.hbm_to_vmem [thread:$0]  %s17, 512, %s19, [#allocation3]
    $region5: #{tpu_custom_call.1} parent=1 // pred_fallthru
      _
    // Predicated region
    $region6: #{tpu_custom_call.1} parent=1 // pred_check
      _
    $region7: #{tpu_custom_call.1} parent=1 // pred_check_branch
      %23 = sbr.rel (0) target = $region9
    $region8: #{tpu_custom_call.1} parent=1 // pred_region
      %25 = vsyncadd [#allocation6], 0
      %s26 = sshll.u32 %s1, 4
      %s27 = int_to_ptr.hbm [resolvable:$true] %s26
      %s28 = sshll.u32 [#allocation5], 4
      %s29 = int_to_ptr.vmem [resolvable:$true] %s28
      %34 = dma.hbm_to_vmem [thread:$0]  %s27, 4096, %s29, [#allocation6], 2048, 2048, 128
    $region9: #{tpu_custom_call.1} parent=1 // pred_fallthru
      _
    // Predicated region
    $region10: #{tpu_custom_call.1} parent=1 // pred_check
      _
    $region11: #{tpu_custom_call.1} parent=1 // pred_check_branch
      %36 = sbr.rel (0) target = $region13
    $region12: #{tpu_custom_call.1} parent=1 // pred_region
      _
    $region13: #{tpu_custom_call.1} parent=1 // pred_fallthru
      _
    // Predicated region
    $region14: #{tpu_custom_call.1} parent=1 // pred_check
      _
    $region15: #{tpu_custom_call.1} parent=1 // pred_check_branch
      %38 = sbr.rel (0) target = $region17
    $region16: #{tpu_custom_call.1} parent=1 // pred_region
      %40 = dma.done [#allocation3], 512
    $region17: #{tpu_custom_call.1} parent=1 // pred_fallthru
      _
    // Predicated region
    $region18: #{tpu_custom_call.1} parent=1 // pred_check
      _
    $region19: #{tpu_custom_call.1} parent=1 // pred_check_branch
      %42 = sbr.rel (0) target = $region21
    $region20: #{tpu_custom_call.1} parent=1 // pred_region
      %44 = dma.done [#allocation6], 4096
    $region21: #{tpu_custom_call.1} parent=1 // pred_fallthru
      _
    %v45 = vld [vmem:[#allocation2] sm:$0xff]
    %v46 = vld [vmem:[#allocation2 + $0x8] sm:$0xff]
    %v47 = vld [vmem:[#allocation2 + $0x10] sm:$0xff]
    %v48 = vld [vmem:[#allocation2 + $0x18] sm:$0xff]
    %v49 = vld [vmem:[#allocation5] sm:$0xff]
    %v50 = vld [vmem:[#allocation5 + $0x8] sm:$0xff]
    %v51 = vld [vmem:[#allocation5 + $0x10] sm:$0xff]
    %v52 = vld [vmem:[#allocation5 + $0x18] sm:$0xff]
    %v53 = vld [vmem:[#allocation5 + $0x20] sm:$0xff]
    %v54 = vld [vmem:[#allocation5 + $0x28] sm:$0xff]
    %v55 = vld [vmem:[#allocation5 + $0x30] sm:$0xff]
    %v56 = vld [vmem:[#allocation5 + $0x38] sm:$0xff]
    %v57 = vld [vmem:[#allocation5 + $0x40] sm:$0xff]
    %v58 = vld [vmem:[#allocation5 + $0x48] sm:$0xff]
    %v59 = vld [vmem:[#allocation5 + $0x50] sm:$0xff]
    %v60 = vld [vmem:[#allocation5 + $0x58] sm:$0xff]
    %v61 = vld [vmem:[#allocation5 + $0x60] sm:$0xff]
    %v62 = vld [vmem:[#allocation5 + $0x68] sm:$0xff]
    %v63 = vld [vmem:[#allocation5 + $0x70] sm:$0xff]
    %v64 = vld [vmem:[#allocation5 + $0x78] sm:$0xff]
    %v65 = vld [vmem:[#allocation5 + $0x80] sm:$0x3]
    %v66 = vld [vmem:[#allocation5 + $0x88] sm:$0x3]
    %v67 = vld [vmem:[#allocation5 + $0x90] sm:$0x3]
    %v68 = vld [vmem:[#allocation5 + $0x98] sm:$0x3]
    %v69 = vld [vmem:[#allocation5 + $0xa0] sm:$0x3]
    %v70 = vld [vmem:[#allocation5 + $0xa8] sm:$0x3]
    %v71 = vld [vmem:[#allocation5 + $0xb0] sm:$0x3]
    %v72 = vld [vmem:[#allocation5 + $0xb8] sm:$0x3]
    %v73 = vld [vmem:[#allocation5 + $0xc0] sm:$0x3]
    %v74 = vld [vmem:[#allocation5 + $0xc8] sm:$0x3]
    %v75 = vld [vmem:[#allocation5 + $0xd0] sm:$0x3]
    %v76 = vld [vmem:[#allocation5 + $0xd8] sm:$0x3]
    %v77 = vld [vmem:[#allocation5 + $0xe0] sm:$0x3]
    %v78 = vld [vmem:[#allocation5 + $0xe8] sm:$0x3]
    %v79 = vld [vmem:[#allocation5 + $0xf0] sm:$0x3]
    %v80 = vld [vmem:[#allocation5 + $0xf8] sm:$0x3]
    %v81 = vld [vmem:[%s2] sm:$0x1]
    %v83 = vperm.slane %v81, 0
    %89 = vst [vmem:[#allocation1] ss:$4 sm:$0xff] %v45
    %s90 = scalar_lea.vmem [#allocation1], 32
    %91 = vst [vmem:[%s90] ss:$4 sm:$0xff] %v46
    %v92 = vld.sshfl [vmem:[#allocation1] sm:$0xff pattern:$0x73625140]
    %v93 = vld.sshfl [vmem:[#allocation1 + $0x8] sm:$0xff pattern:$0x73625140]
    %v94 = vld.sshfl [vmem:[#allocation1 + $0x10] sm:$0xff pattern:$0x73625140]
    %v95 = vld.sshfl [vmem:[#allocation1 + $0x18] sm:$0xff pattern:$0x73625140]
    %v96 = vld.sshfl [vmem:[#allocation1 + $0x20] sm:$0xff pattern:$0x73625140]
    %v97 = vld.sshfl [vmem:[#allocation1 + $0x28] sm:$0xff pattern:$0x73625140]
    %v98 = vld.sshfl [vmem:[#allocation1 + $0x30] sm:$0xff pattern:$0x73625140]
    %v99 = vld.sshfl [vmem:[#allocation1 + $0x38] sm:$0xff pattern:$0x73625140]
    %100 = vst [vmem:[#allocation1] ss:$4 sm:$0xff] %v47
    %101 = vst [vmem:[%s90] ss:$4 sm:$0xff] %v48
    %v102 = vld.sshfl [vmem:[#allocation1] sm:$0xff pattern:$0x73625140]
    %v103 = vld.sshfl [vmem:[#allocation1 + $0x8] sm:$0xff pattern:$0x73625140]
    %v104 = vld.sshfl [vmem:[#allocation1 + $0x10] sm:$0xff pattern:$0x73625140]
    %v105 = vld.sshfl [vmem:[#allocation1 + $0x18] sm:$0xff pattern:$0x73625140]
    %v106 = vld.sshfl [vmem:[#allocation1 + $0x20] sm:$0xff pattern:$0x73625140]
    %v107 = vld.sshfl [vmem:[#allocation1 + $0x28] sm:$0xff pattern:$0x73625140]
    %v108 = vld.sshfl [vmem:[#allocation1 + $0x30] sm:$0xff pattern:$0x73625140]
    %v109 = vld.sshfl [vmem:[#allocation1 + $0x38] sm:$0xff pattern:$0x73625140]
    %126 = vmatpush.xpose.msra.mxu0 0.0
    %127 = vmatpush.xpose.msra.mxu0 0.0
    %128 = vmatpush.xpose.msra.mxu0 0.0
    %129 = vmatpush.xpose.msra.mxu0 0.0
    %130 = vmatpush.xpose.msra.mxu0 0.0
    %131 = vmatpush.xpose.msra.mxu0 0.0
    %132 = vmatpush.xpose.msra.mxu0 0.0
    %133 = vmatpush.xpose.msra.mxu0 0.0
    %134 = vmatpush.xpose.msra.mxu0 0.0
    %135 = vmatpush.xpose.msra.mxu0 0.0
    %136 = vmatpush.xpose.msra.mxu0 0.0
    %137 = vmatpush.xpose.msra.mxu0 0.0
    %138 = vmatpush.xpose.msra.mxu0 0.0
    %139 = vmatpush.xpose.msra.mxu0 0.0
    %140 = vmatpush.xpose.msra.mxu0 %v65
    %141 = vmatpush.xpose.msra.mxu0 %v49
    %142 = vmatmul.f32.gmra.mxu0 %v92
    %v143 = vpop.f32.mrf.mxu0
    %v144 = vadd.f32 %v83, %v143
    %145 = vdwg.mxu0
    %146 = vmatpush.xpose.msra.mxu0 0.0
    %147 = vmatpush.xpose.msra.mxu0 0.0
    %148 = vmatpush.xpose.msra.mxu0 0.0
    %149 = vmatpush.xpose.msra.mxu0 0.0
    %150 = vmatpush.xpose.msra.mxu0 0.0
    %151 = vmatpush.xpose.msra.mxu0 0.0
    %152 = vmatpush.xpose.msra.mxu0 0.0
    %153 = vmatpush.xpose.msra.mxu0 0.0
    %154 = vmatpush.xpose.msra.mxu0 0.0
    %155 = vmatpush.xpose.msra.mxu0 0.0
    %156 = vmatpush.xpose.msra.mxu0 0.0
    %157 = vmatpush.xpose.msra.mxu0 0.0
    %158 = vmatpush.xpose.msra.mxu0 0.0
    %159 = vmatpush.xpose.msra.mxu0 0.0
    %160 = vmatpush.xpose.msra.mxu0 %v66
    %161 = vmatpush.xpose.msra.mxu0 %v50
    %162 = vmatmul.f32.gmra.mxu0 %v93
    %v163 = vpop.f32.mrf.mxu0
    %v164 = vadd.f32 %v144, %v163
    %165 = vdwg.mxu0
    %166 = vmatpush.xpose.msra.mxu0 0.0
    %167 = vmatpush.xpose.msra.mxu0 0.0
    %168 = vmatpush.xpose.msra.mxu0 0.0
    %169 = vmatpush.xpose.msra.mxu0 0.0
    %170 = vmatpush.xpose.msra.mxu0 0.0
    %171 = vmatpush.xpose.msra.mxu0 0.0
    %172 = vmatpush.xpose.msra.mxu0 0.0
    %173 = vmatpush.xpose.msra.mxu0 0.0
    %174 = vmatpush.xpose.msra.mxu0 0.0
    %175 = vmatpush.xpose.msra.mxu0 0.0
    %176 = vmatpush.xpose.msra.mxu0 0.0
    %177 = vmatpush.xpose.msra.mxu0 0.0
    %178 = vmatpush.xpose.msra.mxu0 0.0
    %179 = vmatpush.xpose.msra.mxu0 0.0
    %180 = vmatpush.xpose.msra.mxu0 %v67
    %181 = vmatpush.xpose.msra.mxu0 %v51
    %182 = vmatmul.f32.gmra.mxu0 %v94
    %v183 = vpop.f32.mrf.mxu0
    %v184 = vadd.f32 %v164, %v183
    %185 = vdwg.mxu0
    %186 = vmatpush.xpose.msra.mxu0 0.0
    %187 = vmatpush.xpose.msra.mxu0 0.0
    %188 = vmatpush.xpose.msra.mxu0 0.0
    %189 = vmatpush.xpose.msra.mxu0 0.0
    %190 = vmatpush.xpose.msra.mxu0 0.0
    %191 = vmatpush.xpose.msra.mxu0 0.0
    %192 = vmatpush.xpose.msra.mxu0 0.0
    %193 = vmatpush.xpose.msra.mxu0 0.0
    %194 = vmatpush.xpose.msra.mxu0 0.0
    %195 = vmatpush.xpose.msra.mxu0 0.0
    %196 = vmatpush.xpose.msra.mxu0 0.0
    %197 = vmatpush.xpose.msra.mxu0 0.0
    %198 = vmatpush.xpose.msra.mxu0 0.0
    %199 = vmatpush.xpose.msra.mxu0 0.0
    %200 = vmatpush.xpose.msra.mxu0 %v68
    %201 = vmatpush.xpose.msra.mxu0 %v52
    %202 = vmatmul.f32.gmra.mxu0 %v95
    %v203 = vpop.f32.mrf.mxu0
    %v204 = vadd.f32 %v184, %v203
    %205 = vdwg.mxu0
    %206 = vmatpush.xpose.msra.mxu0 0.0
    %207 = vmatpush.xpose.msra.mxu0 0.0
    %208 = vmatpush.xpose.msra.mxu0 0.0
    %209 = vmatpush.xpose.msra.mxu0 0.0
    %210 = vmatpush.xpose.msra.mxu0 0.0
    %211 = vmatpush.xpose.msra.mxu0 0.0
    %212 = vmatpush.xpose.msra.mxu0 0.0
    %213 = vmatpush.xpose.msra.mxu0 0.0
    %214 = vmatpush.xpose.msra.mxu0 0.0
    %215 = vmatpush.xpose.msra.mxu0 0.0
    %216 = vmatpush.xpose.msra.mxu0 0.0
    %217 = vmatpush.xpose.msra.mxu0 0.0
    %218 = vmatpush.xpose.msra.mxu0 0.0
    %219 = vmatpush.xpose.msra.mxu0 0.0
    %220 = vmatpush.xpose.msra.mxu0 %v69
    %221 = vmatpush.xpose.msra.mxu0 %v53
    %222 = vmatmul.f32.gmra.mxu0 %v96
    %v223 = vpop.f32.mrf.mxu0
    %v224 = vadd.f32 %v204, %v223
    %225 = vdwg.mxu0
    %226 = vmatpush.xpose.msra.mxu0 0.0
    %227 = vmatpush.xpose.msra.mxu0 0.0
    %228 = vmatpush.xpose.msra.mxu0 0.0
    %229 = vmatpush.xpose.msra.mxu0 0.0
    %230 = vmatpush.xpose.msra.mxu0 0.0
    %231 = vmatpush.xpose.msra.mxu0 0.0
    %232 = vmatpush.xpose.msra.mxu0 0.0
    %233 = vmatpush.xpose.msra.mxu0 0.0
    %234 = vmatpush.xpose.msra.mxu0 0.0
    %235 = vmatpush.xpose.msra.mxu0 0.0
    %236 = vmatpush.xpose.msra.mxu0 0.0
    %237 = vmatpush.xpose.msra.mxu0 0.0
    %238 = vmatpush.xpose.msra.mxu0 0.0
    %239 = vmatpush.xpose.msra.mxu0 0.0
    %240 = vmatpush.xpose.msra.mxu0 %v70
    %241 = vmatpush.xpose.msra.mxu0 %v54
    %242 = vmatmul.f32.gmra.mxu0 %v97
    %v243 = vpop.f32.mrf.mxu0
    %v244 = vadd.f32 %v224, %v243
    %245 = vdwg.mxu0
    %246 = vmatpush.xpose.msra.mxu0 0.0
    %247 = vmatpush.xpose.msra.mxu0 0.0
    %248 = vmatpush.xpose.msra.mxu0 0.0
    %249 = vmatpush.xpose.msra.mxu0 0.0
    %250 = vmatpush.xpose.msra.mxu0 0.0
    %251 = vmatpush.xpose.msra.mxu0 0.0
    %252 = vmatpush.xpose.msra.mxu0 0.0
    %253 = vmatpush.xpose.msra.mxu0 0.0
    %254 = vmatpush.xpose.msra.mxu0 0.0
    %255 = vmatpush.xpose.msra.mxu0 0.0
    %256 = vmatpush.xpose.msra.mxu0 0.0
    %257 = vmatpush.xpose.msra.mxu0 0.0
    %258 = vmatpush.xpose.msra.mxu0 0.0
    %259 = vmatpush.xpose.msra.mxu0 0.0
    %260 = vmatpush.xpose.msra.mxu0 %v71
    %261 = vmatpush.xpose.msra.mxu0 %v55
    %262 = vmatmul.f32.gmra.mxu0 %v98
    %v263 = vpop.f32.mrf.mxu0
    %v264 = vadd.f32 %v244, %v263
    %265 = vdwg.mxu0
    %266 = vmatpush.xpose.msra.mxu0 0.0
    %267 = vmatpush.xpose.msra.mxu0 0.0
    %268 = vmatpush.xpose.msra.mxu0 0.0
    %269 = vmatpush.xpose.msra.mxu0 0.0
    %270 = vmatpush.xpose.msra.mxu0 0.0
    %271 = vmatpush.xpose.msra.mxu0 0.0
    %272 = vmatpush.xpose.msra.mxu0 0.0
    %273 = vmatpush.xpose.msra.mxu0 0.0
    %274 = vmatpush.xpose.msra.mxu0 0.0
    %275 = vmatpush.xpose.msra.mxu0 0.0
    %276 = vmatpush.xpose.msra.mxu0 0.0
    %277 = vmatpush.xpose.msra.mxu0 0.0
    %278 = vmatpush.xpose.msra.mxu0 0.0
    %279 = vmatpush.xpose.msra.mxu0 0.0
    %280 = vmatpush.xpose.msra.mxu0 %v72
    %281 = vmatpush.xpose.msra.mxu0 %v56
    %282 = vmatmul.f32.gmra.mxu0 %v99
    %v283 = vpop.f32.mrf.mxu0
    %v284 = vadd.f32 %v264, %v283
    %285 = vdwg.mxu0
    %286 = vmatpush.xpose.msra.mxu0 0.0
    %287 = vmatpush.xpose.msra.mxu0 0.0
    %288 = vmatpush.xpose.msra.mxu0 0.0
    %289 = vmatpush.xpose.msra.mxu0 0.0
    %290 = vmatpush.xpose.msra.mxu0 0.0
    %291 = vmatpush.xpose.msra.mxu0 0.0
    %292 = vmatpush.xpose.msra.mxu0 0.0
    %293 = vmatpush.xpose.msra.mxu0 0.0
    %294 = vmatpush.xpose.msra.mxu0 0.0
    %295 = vmatpush.xpose.msra.mxu0 0.0
    %296 = vmatpush.xpose.msra.mxu0 0.0
    %297 = vmatpush.xpose.msra.mxu0 0.0
    %298 = vmatpush.xpose.msra.mxu0 0.0
    %299 = vmatpush.xpose.msra.mxu0 0.0
    %300 = vmatpush.xpose.msra.mxu0 %v73
    %301 = vmatpush.xpose.msra.mxu0 %v57
    %302 = vmatmul.f32.gmra.mxu0 %v102
    %v303 = vpop.f32.mrf.mxu0
    %v304 = vadd.f32 %v284, %v303
    %305 = vdwg.mxu0
    %306 = vmatpush.xpose.msra.mxu0 0.0
    %307 = vmatpush.xpose.msra.mxu0 0.0
    %308 = vmatpush.xpose.msra.mxu0 0.0
    %309 = vmatpush.xpose.msra.mxu0 0.0
    %310 = vmatpush.xpose.msra.mxu0 0.0
    %311 = vmatpush.xpose.msra.mxu0 0.0
    %312 = vmatpush.xpose.msra.mxu0 0.0
    %313 = vmatpush.xpose.msra.mxu0 0.0
    %314 = vmatpush.xpose.msra.mxu0 0.0
    %315 = vmatpush.xpose.msra.mxu0 0.0
    %316 = vmatpush.xpose.msra.mxu0 0.0
    %317 = vmatpush.xpose.msra.mxu0 0.0
    %318 = vmatpush.xpose.msra.mxu0 0.0
    %319 = vmatpush.xpose.msra.mxu0 0.0
    %320 = vmatpush.xpose.msra.mxu0 %v74
    %321 = vmatpush.xpose.msra.mxu0 %v58
    %322 = vmatmul.f32.gmra.mxu0 %v103
    %v323 = vpop.f32.mrf.mxu0
    %v324 = vadd.f32 %v304, %v323
    %325 = vdwg.mxu0
    %326 = vmatpush.xpose.msra.mxu0 0.0
    %327 = vmatpush.xpose.msra.mxu0 0.0
    %328 = vmatpush.xpose.msra.mxu0 0.0
    %329 = vmatpush.xpose.msra.mxu0 0.0
    %330 = vmatpush.xpose.msra.mxu0 0.0
    %331 = vmatpush.xpose.msra.mxu0 0.0
    %332 = vmatpush.xpose.msra.mxu0 0.0
    %333 = vmatpush.xpose.msra.mxu0 0.0
    %334 = vmatpush.xpose.msra.mxu0 0.0
    %335 = vmatpush.xpose.msra.mxu0 0.0
    %336 = vmatpush.xpose.msra.mxu0 0.0
    %337 = vmatpush.xpose.msra.mxu0 0.0
    %338 = vmatpush.xpose.msra.mxu0 0.0
    %339 = vmatpush.xpose.msra.mxu0 0.0
    %340 = vmatpush.xpose.msra.mxu0 %v75
    %341 = vmatpush.xpose.msra.mxu0 %v59
    %342 = vmatmul.f32.gmra.mxu0 %v104
    %v343 = vpop.f32.mrf.mxu0
    %v344 = vadd.f32 %v324, %v343
    %345 = vdwg.mxu0
    %346 = vmatpush.xpose.msra.mxu0 0.0
    %347 = vmatpush.xpose.msra.mxu0 0.0
    %348 = vmatpush.xpose.msra.mxu0 0.0
    %349 = vmatpush.xpose.msra.mxu0 0.0
    %350 = vmatpush.xpose.msra.mxu0 0.0
    %351 = vmatpush.xpose.msra.mxu0 0.0
    %352 = vmatpush.xpose.msra.mxu0 0.0
    %353 = vmatpush.xpose.msra.mxu0 0.0
    %354 = vmatpush.xpose.msra.mxu0 0.0
    %355 = vmatpush.xpose.msra.mxu0 0.0
    %356 = vmatpush.xpose.msra.mxu0 0.0
    %357 = vmatpush.xpose.msra.mxu0 0.0
    %358 = vmatpush.xpose.msra.mxu0 0.0
    %359 = vmatpush.xpose.msra.mxu0 0.0
    %360 = vmatpush.xpose.msra.mxu0 %v76
    %361 = vmatpush.xpose.msra.mxu0 %v60
    %362 = vmatmul.f32.gmra.mxu0 %v105
    %v363 = vpop.f32.mrf.mxu0
    %v364 = vadd.f32 %v344, %v363
    %365 = vdwg.mxu0
    %366 = vmatpush.xpose.msra.mxu0 0.0
    %367 = vmatpush.xpose.msra.mxu0 0.0
    %368 = vmatpush.xpose.msra.mxu0 0.0
    %369 = vmatpush.xpose.msra.mxu0 0.0
    %370 = vmatpush.xpose.msra.mxu0 0.0
    %371 = vmatpush.xpose.msra.mxu0 0.0
    %372 = vmatpush.xpose.msra.mxu0 0.0
    %373 = vmatpush.xpose.msra.mxu0 0.0
    %374 = vmatpush.xpose.msra.mxu0 0.0
    %375 = vmatpush.xpose.msra.mxu0 0.0
    %376 = vmatpush.xpose.msra.mxu0 0.0
    %377 = vmatpush.xpose.msra.mxu0 0.0
    %378 = vmatpush.xpose.msra.mxu0 0.0
    %379 = vmatpush.xpose.msra.mxu0 0.0
    %380 = vmatpush.xpose.msra.mxu0 %v77
    %381 = vmatpush.xpose.msra.mxu0 %v61
    %382 = vmatmul.f32.gmra.mxu0 %v106
    %v383 = vpop.f32.mrf.mxu0
    %v384 = vadd.f32 %v364, %v383
    %385 = vdwg.mxu0
    %386 = vmatpush.xpose.msra.mxu0 0.0
    %387 = vmatpush.xpose.msra.mxu0 0.0
    %388 = vmatpush.xpose.msra.mxu0 0.0
    %389 = vmatpush.xpose.msra.mxu0 0.0
    %390 = vmatpush.xpose.msra.mxu0 0.0
    %391 = vmatpush.xpose.msra.mxu0 0.0
    %392 = vmatpush.xpose.msra.mxu0 0.0
    %393 = vmatpush.xpose.msra.mxu0 0.0
    %394 = vmatpush.xpose.msra.mxu0 0.0
    %395 = vmatpush.xpose.msra.mxu0 0.0
    %396 = vmatpush.xpose.msra.mxu0 0.0
    %397 = vmatpush.xpose.msra.mxu0 0.0
    %398 = vmatpush.xpose.msra.mxu0 0.0
    %399 = vmatpush.xpose.msra.mxu0 0.0
    %400 = vmatpush.xpose.msra.mxu0 %v78
    %401 = vmatpush.xpose.msra.mxu0 %v62
    %402 = vmatmul.f32.gmra.mxu0 %v107
    %v403 = vpop.f32.mrf.mxu0
    %v404 = vadd.f32 %v384, %v403
    %405 = vdwg.mxu0
    %406 = vmatpush.xpose.msra.mxu0 0.0
    %407 = vmatpush.xpose.msra.mxu0 0.0
    %408 = vmatpush.xpose.msra.mxu0 0.0
    %409 = vmatpush.xpose.msra.mxu0 0.0
    %410 = vmatpush.xpose.msra.mxu0 0.0
    %411 = vmatpush.xpose.msra.mxu0 0.0
    %412 = vmatpush.xpose.msra.mxu0 0.0
    %413 = vmatpush.xpose.msra.mxu0 0.0
    %414 = vmatpush.xpose.msra.mxu0 0.0
    %415 = vmatpush.xpose.msra.mxu0 0.0
    %416 = vmatpush.xpose.msra.mxu0 0.0
    %417 = vmatpush.xpose.msra.mxu0 0.0
    %418 = vmatpush.xpose.msra.mxu0 0.0
    %419 = vmatpush.xpose.msra.mxu0 0.0
    %420 = vmatpush.xpose.msra.mxu0 %v79
    %421 = vmatpush.xpose.msra.mxu0 %v63
    %422 = vmatmul.f32.gmra.mxu0 %v108
    %v423 = vpop.f32.mrf.mxu0
    %v424 = vadd.f32 %v404, %v423
    %425 = vdwg.mxu0
    %426 = vmatpush.xpose.msra.mxu0 0.0
    %427 = vmatpush.xpose.msra.mxu0 0.0
    %428 = vmatpush.xpose.msra.mxu0 0.0
    %429 = vmatpush.xpose.msra.mxu0 0.0
    %430 = vmatpush.xpose.msra.mxu0 0.0
    %431 = vmatpush.xpose.msra.mxu0 0.0
    %432 = vmatpush.xpose.msra.mxu0 0.0
    %433 = vmatpush.xpose.msra.mxu0 0.0
    %434 = vmatpush.xpose.msra.mxu0 0.0
    %435 = vmatpush.xpose.msra.mxu0 0.0
    %436 = vmatpush.xpose.msra.mxu0 0.0
    %437 = vmatpush.xpose.msra.mxu0 0.0
    %438 = vmatpush.xpose.msra.mxu0 0.0
    %439 = vmatpush.xpose.msra.mxu0 0.0
    %440 = vmatpush.xpose.msra.mxu0 %v80
    %441 = vmatpush.xpose.msra.mxu0 %v64
    %442 = vmatmul.f32.gmra.mxu0 %v109
    %v443 = vpop.f32.mrf.mxu0
    %v444 = vadd.f32 %v424, %v443
    %445 = vdwg.mxu0
    %vm446 = vcmask 74752
    %447 = vst.msk [vmem:[#allocation7] sm:$0x3] %vm446, %v444
    // Predicated region
    $region22: #{tpu_custom_call.1} parent=1 // pred_check
      _
    $region23: #{tpu_custom_call.1} parent=1 // pred_check_branch
      %449 = sbr.rel (0) target = $region25
    $region24: #{tpu_custom_call.1} parent=1 // pred_region
      %451 = vsyncadd [#allocation4], 0
      %s453 = sshll.u32 [#allocation7], 4
      %s454 = int_to_ptr.vmem [resolvable:$true] %s453
      %s455 = sshll.u32 %s3, 4
      %s456 = int_to_ptr.hbm [resolvable:$true] %s455
      %458 = dma.vmem_to_hbm [thread:$0]  %s454, 32, %s456, [#allocation4]
    $region25: #{tpu_custom_call.1} parent=1 // pred_fallthru
      _
    // Predicated region
    $region26: #{tpu_custom_call.1} parent=1 // pred_check
      _
    $region27: #{tpu_custom_call.1} parent=1 // pred_check_branch
      %460 = sbr.rel (0) target = $region29
    $region28: #{tpu_custom_call.1} parent=1 // pred_region
      %462 = dma.done [#allocation4], 32
    $region29: #{tpu_custom_call.1} parent=1 // pred_fallthru
      _
    %463 = vsyncpa [#allocation3], 1
    %464 = vsyncpa [#allocation6], 1
    %465 = vsyncpa [#allocation4], 1

</llo_original>
